<compile_context>
chip_gen: v7x
topology: tpu7x:2x2x1
jax: 0.10.0
libtpu: 0.0.40
codegen_flags: <defaults>
</compile_context>

<pallas_src>
import jax
import jax.numpy as jnp
from jax.experimental import pallas as pl
from jax.experimental.pallas import tpu as pltpu

IN_FEAT = 784
IN_PAD = 896          # 7 * 128 -> full lane tiles on the K dimension
HID = 256
OUT = 1
DROP_P = 0.1


def _round_up(n, m):
    return ((n + m - 1) // m) * m


def _disc_kernel_eval(x_ref, w1_ref, b1_ref, w2_ref, b2_ref, o_ref):
    # hidden = relu(x @ W1 + b1); x/W1 are bf16, MXU accumulates in f32.
    h = jnp.dot(x_ref[...], w1_ref[...], preferred_element_type=jnp.float32)
    h = jnp.maximum(h + b1_ref[...], 0.0)                     # (TB, HID) + (1, HID)
    # N=1 output layer: VPU multiply + lane reduction (avoid a 1-column MXU matmul).
    z = jnp.sum(h * w2_ref[...], axis=-1, keepdims=True) + b2_ref[...]
    o_ref[...] = jax.nn.sigmoid(z)


def _disc_kernel_train(x_ref, w1_ref, b1_ref, w2_ref, b2_ref, m_ref, o_ref):
    h = jnp.dot(x_ref[...], w1_ref[...], preferred_element_type=jnp.float32)
    h = jnp.maximum(h + b1_ref[...], 0.0)
    h = h * m_ref[...]                                        # pre-scaled dropout mask
    z = jnp.sum(h * w2_ref[...], axis=-1, keepdims=True) + b2_ref[...]
    o_ref[...] = jax.nn.sigmoid(z)


def discriminator_forward(x, w1, b1, w2, b2, *, training=False, dropout_key=None,
                          batch_tile=512):
    """Forward pass of the Discriminator.

    x : (B, 784) float32
    w1: (784, 256), b1: (1, 256), w2: (1, 256) [row vector], b2: (1, 1) -- all float32.
    Returns (B, 1) float32 in (0, 1).
    """
    B = x.shape[0]
    TB = min(_round_up(B, 8), batch_tile)     # batch tile (multiple of 8 sublanes)
    B_pad = _round_up(B, TB)

    # Host-side prep (done once per call, outside the kernel):
    #   - zero-pad K: 784 -> 896, zero-pad batch to a multiple of TB
    #   - cast MXU operands to bf16
    xp = jnp.zeros((B_pad, IN_PAD), jnp.bfloat16)
    xp = xp.at[:B, :IN_FEAT].set(x.astype(jnp.bfloat16))
    w1p = jnp.zeros((IN_PAD, HID), jnp.bfloat16)
    w1p = w1p.at[:IN_FEAT, :].set(w1.astype(jnp.bfloat16))
    b1p = b1.reshape(1, HID).astype(jnp.float32)
    w2p = w2.reshape(1, HID).astype(jnp.float32)
    b2p = b2.reshape(1, 1).astype(jnp.float32)

    grid = (B_pad // TB,)

    base_in_specs = [
        pl.BlockSpec((TB, IN_PAD), lambda i: (i, 0)),     # x tile follows the grid
        pl.BlockSpec((IN_PAD, HID), lambda i: (0, 0)),    # W1 resident across tiles
        pl.BlockSpec((1, HID), lambda i: (0, 0)),         # b1
        pl.BlockSpec((1, HID), lambda i: (0, 0)),         # w2 (row)
        pl.BlockSpec((1, 1), lambda i: (0, 0)),           # b2
    ]
    out_spec = pl.BlockSpec((TB, OUT), lambda i: (i, 0))

    if training:
        if dropout_key is None:
            dropout_key = jax.random.PRNGKey(0)
        # Inverted dropout (PyTorch train-mode semantics), one row of randomness per
        # batch row, so every grid tile gets an independent mask.
        keep = jax.random.bernoulli(dropout_key, 1.0 - DROP_P, (B_pad, HID))
        mask = keep.astype(jnp.float32) * (1.0 / (1.0 - DROP_P))
        kernel = _disc_kernel_train
        in_specs = base_in_specs + [pl.BlockSpec((TB, HID), lambda i: (i, 0))]
        args = (xp, w1p, b1p, w2p, b2p, mask)
    else:
        kernel = _disc_kernel_eval
        in_specs = base_in_specs
        args = (xp, w1p, b1p, w2p, b2p)

    out = pl.pallas_call(
        kernel,
        out_shape=jax.ShapeDtypeStruct((B_pad, OUT), jnp.float32),
        grid=grid,
        in_specs=in_specs,
        out_specs=out_spec,
        compiler_params=pltpu.CompilerParams(
            dimension_semantics=("parallel",)),
    )(*args)
    return out[:B]


def init_params(key):
    """Deterministic init mimicking nn.Linear's uniform(-1/sqrt(fan_in), 1/sqrt(fan_in)).

    Note: w1 is stored as (in, out) (transpose of PyTorch's weight) and w2 as a
    (1, HID) row vector (used via multiply + lane reduction in the kernel).
    """
    k1, k2, k3, k4 = jax.random.split(key, 4)
    bound1 = 1.0 / jnp.sqrt(IN_FEAT)
    bound2 = 1.0 / jnp.sqrt(HID)
    w1 = jax.random.uniform(k1, (IN_FEAT, HID), jnp.float32, -bound1, bound1)
    b1 = jax.random.uniform(k2, (1, HID), jnp.float32, -bound1, bound1)
    w2 = jax.random.uniform(k3, (1, HID), jnp.float32, -bound2, bound2)
    b2 = jax.random.uniform(k4, (1, 1), jnp.float32, -bound2, bound2)
    return w1, b1, w2, b2


if __name__ == "__main__":
    key = jax.random.PRNGKey(0)
    kx, kp, kd = jax.random.split(key, 3)

    B = 8
    x = jax.random.normal(kx, (B, IN_FEAT), jnp.float32)
    w1, b1, w2, b2 = init_params(kp)

    # Eval mode (dropout = identity) -- compare against a pure-JAX reference that
    # uses the same bf16-cast operands for the first matmul.
    out_eval = jax.block_until_ready(
        discriminator_forward(x, w1, b1, w2, b2, training=False))

    xb = x.astype(jnp.bfloat16).astype(jnp.float32)
    w1b = w1.astype(jnp.bfloat16).astype(jnp.float32)
    h_ref = jnp.maximum(xb @ w1b + b1, 0.0)
    ref = jax.nn.sigmoid(jnp.sum(h_ref * w2, axis=-1, keepdims=True) + b2)

    assert out_eval.shape == (B, OUT)
    assert jnp.allclose(out_eval, ref, atol=1e-3, rtol=1e-3), "mismatch vs reference"

    # Train mode (dropout p=0.1 via host-generated mask, deterministic key).
    out_train = jax.block_until_ready(
        discriminator_forward(x, w1, b1, w2, b2, training=True, dropout_key=kd))
    assert out_train.shape == (B, OUT)
    assert bool(jnp.all((out_train >= 0.0) & (out_train <= 1.0)))

    print("KERNEL_OK")
</pallas_src>

<mosaic_0001>
module attributes {stable_mosaic.version = 11 : i64} {
  func.func @_disc_kernel_eval(%arg0: i32, %arg1: memref<8x896xbf16, #tpu.memory_space<vmem>>, %arg2: memref<896x256xbf16, #tpu.memory_space<vmem>>, %arg3: memref<1x256xf32, #tpu.memory_space<vmem>>, %arg4: memref<1x256xf32, #tpu.memory_space<vmem>>, %arg5: memref<1x1xf32, #tpu.memory_space<vmem>>, %arg6: memref<8x1xf32, #tpu.memory_space<vmem>>) attributes {dimension_semantics = [#tpu.dimension_semantics<parallel>], iteration_bounds = array<i64: 1>, scalar_prefetch = 0 : i64, scratch_operands = 0 : i64, tpu.core_type = #tpu.core_type<tc>, window_params = [{transform_indices = @transform_0, window_bounds = array<i64: 8, 896>}, {pipeline_mode = #tpu.pipeline_mode<synchronous>, transform_indices = @transform_1, window_bounds = array<i64: 896, 256>}, {pipeline_mode = #tpu.pipeline_mode<synchronous>, transform_indices = @transform_2, window_bounds = array<i64: 1, 256>}, {pipeline_mode = #tpu.pipeline_mode<synchronous>, transform_indices = @transform_3, window_bounds = array<i64: 1, 256>}, {pipeline_mode = #tpu.pipeline_mode<synchronous>, transform_indices = @transform_4, window_bounds = array<i64: 1, 1>}, {transform_indices = @transform_5, window_bounds = array<i64: 8, 1>}]} {
    %c0 = arith.constant 0 : index
    %c0_0 = arith.constant 0 : index
    %0 = vector.load %arg1[%c0, %c0_0] : memref<8x896xbf16, #tpu.memory_space<vmem>>, vector<8x896xbf16>
    %c0_1 = arith.constant 0 : index
    %c0_2 = arith.constant 0 : index
    %1 = vector.load %arg2[%c0_1, %c0_2] : memref<896x256xbf16, #tpu.memory_space<vmem>>, vector<896x256xbf16>
    %cst = arith.constant dense<0.000000e+00> : vector<8x256xf32>
    %2 = tpu.matmul %0, %1, %cst {dimension_numbers = #tpu.dot_dimension_numbers<[1], [0], [0], [1], [0, 0, 1, 1], [], []>} : vector<8x896xbf16>, vector<896x256xbf16>, vector<8x256xf32> -> vector<8x256xf32>
    %c0_3 = arith.constant 0 : index
    %c0_4 = arith.constant 0 : index
    %3 = vector.load %arg3[%c0_3, %c0_4] : memref<1x256xf32, #tpu.memory_space<vmem>>, vector<1x256xf32>
    %4 = vector.broadcast %3 : vector<1x256xf32> to vector<8x256xf32>
    %5 = arith.addf %2, %4 : vector<8x256xf32>
    %cst_5 = arith.constant 0.000000e+00 : f32
    %6 = vector.broadcast %cst_5 : f32 to vector<8x256xf32>
    %7 = arith.maximumf %5, %6 : vector<8x256xf32>
    %c0_6 = arith.constant 0 : index
    %c0_7 = arith.constant 0 : index
    %8 = vector.load %arg4[%c0_6, %c0_7] : memref<1x256xf32, #tpu.memory_space<vmem>>, vector<1x256xf32>
    %9 = vector.broadcast %8 : vector<1x256xf32> to vector<8x256xf32>
    %10 = arith.mulf %7, %9 : vector<8x256xf32>
    %cst_8 = arith.constant dense<0.000000e+00> : vector<8xf32>
    %11 = vector.multi_reduction <add>, %10, %cst_8 [1] : vector<8x256xf32> to vector<8xf32>
    %12 = vector.shape_cast %11 : vector<8xf32> to vector<8x1xf32>
    %c0_9 = arith.constant 0 : index
    %c0_10 = arith.constant 0 : index
    %13 = vector.load %arg5[%c0_9, %c0_10] : memref<1x1xf32, #tpu.memory_space<vmem>>, vector<1x1xf32>
    %14 = vector.broadcast %13 : vector<1x1xf32> to vector<8x1xf32>
    %15 = arith.addf %12, %14 : vector<8x1xf32>
    %16 = arith.negf %15 : vector<8x1xf32>
    %17 = math.exp %16 : vector<8x1xf32>
    %cst_11 = arith.constant 1.000000e+00 : f32
    %18 = vector.broadcast %cst_11 : f32 to vector<8x1xf32>
    %19 = arith.addf %18, %17 : vector<8x1xf32>
    %20 = arith.divf %18, %19 : vector<8x1xf32>
    %c0_12 = arith.constant 0 : index
    %c0_13 = arith.constant 0 : index
    %21 = vector.load %arg6[%c0_12, %c0_13] : memref<8x1xf32, #tpu.memory_space<vmem>>, vector<8x1xf32>
    tpu.vector_store %arg6[%c0_12, %c0_13], %20 {strides = array<i32>} : memref<8x1xf32, #tpu.memory_space<vmem>>, vector<8x1xf32>,
    return
  }
  func.func @transform_0(%arg0: i32) -> (i32, i32) {
    %c0_i32 = arith.constant 0 : i32
    %c0_i32_0 = arith.constant 0 : i32
    return %arg0, %c0_i32 : i32, i32
  }
  func.func @transform_1(%arg0: i32) -> (i32, i32) {
    %c0_i32 = arith.constant 0 : i32
    %c0_i32_0 = arith.constant 0 : i32
    %c0_i32_1 = arith.constant 0 : i32
    return %c0_i32, %c0_i32_0 : i32, i32
  }
  func.func @transform_2(%arg0: i32) -> (i32, i32) {
    %c0_i32 = arith.constant 0 : i32
    %c0_i32_0 = arith.constant 0 : i32
    %c0_i32_1 = arith.constant 0 : i32
    return %c0_i32, %c0_i32_0 : i32, i32
  }
  func.func @transform_3(%arg0: i32) -> (i32, i32) {
    %c0_i32 = arith.constant 0 : i32
    %c0_i32_0 = arith.constant 0 : i32
    %c0_i32_1 = arith.constant 0 : i32
    return %c0_i32, %c0_i32_0 : i32, i32
  }
  func.func @transform_4(%arg0: i32) -> (i32, i32) {
    %c0_i32 = arith.constant 0 : i32
    %c0_i32_0 = arith.constant 0 : i32
    %c0_i32_1 = arith.constant 0 : i32
    return %c0_i32, %c0_i32_0 : i32, i32
  }
  func.func @transform_5(%arg0: i32) -> (i32, i32) {
    %c0_i32 = arith.constant 0 : i32
    %c0_i32_0 = arith.constant 0 : i32
    return %arg0, %c0_i32 : i32, i32
  }
}

</mosaic_0001>

<llo_original>
// kernel: tpu_custom_call.1
$region0: #{tpu_custom_call.1}
  #allocation0 [shape = 'u32[]', space=smem, size = 0x4, offset = 0x4, fixed_abs, tag = 'smem constant byte address 0x4 - core index']
  #allocation1 [shape = 'u32[144,128]{1,0:T(1,128)}', space=vmem, size = 0x12000, scoped, tag = 'internal scratch']
  #allocation2 [shape = 'f32[1,1]{1,0:T(1,128)S(1)}', space=vmem, size = 0x200, scoped, tag = 'scoped memory for tpu_custom_call.1']
  %s0 = inlined_call_operand.hbm [shape: bf16[8,896], index: 0, kind: input, shape index: {}]
  %s1 = inlined_call_operand.hbm [shape: bf16[896,256], index: 1, kind: input, shape index: {}]
  %s2 = inlined_call_operand.vmem [shape: f32[1,256], index: 2, kind: input, shape index: {}]
  %s3 = inlined_call_operand.vmem [shape: f32[1,256], index: 3, kind: input, shape index: {}]
  %s4 = inlined_call_operand.<no memory space> [shape: f32[1,1], index: 4, kind: input, shape index: {}]
  %s5 = inlined_call_operand.vmem [shape: f32[8,1], index: 5, kind: output, shape index: {}]
  %s6 = sld [smem:[#allocation0]]
  $region38: #{tpu_custom_call.1} parent=0
    _
  %s8 = ssub.s32 1, %s6
  %s9 = scalar_select 0, %s8, %s6
  %v10 = vstv %s4
  %11 = vst [vmem:[#allocation2] sm:$0x1] %v10
  $region1: #{tpu_custom_call.1} parent=0
    #allocation3 [shape = 'u8[14336]{0}', space=vmem, size = 0x3800, scoped, tag = 'input window, operand 0, single buffered']
    #allocation4 [shape = 's32[1]{0}', space=sflag, size = 0x4, scoped, tag = 'scoped memory for tpu_custom_call.1']
    #allocation5 [shape = 'u8[458752]{0}', space=vmem, size = 0x70000, scoped, tag = 'input window, operand 1, single buffered']
    #allocation6 [shape = 's32[1]{0}', space=sflag, size = 0x4, scoped, tag = 'scoped memory for tpu_custom_call.1']
    %12 = vsyncpa [#allocation4], 0
    %13 = vsyncpa [#allocation6], 0
    // Predicated region
    $region2: #{tpu_custom_call.1} parent=1 // pred_check
      _
    $region3: #{tpu_custom_call.1} parent=1 // pred_check_branch
      %15 = sbr.rel (0) target = $region5
    $region4: #{tpu_custom_call.1} parent=1 // pred_region
      %s17 = ssub.s32 448, 448
      %18 = vsyncadd [#allocation4], %s17
      %s20 = sshll.u32 [#allocation3], 4
      %s21 = int_to_ptr.vmem [resolvable:$true] %s20
      %23 = dma.hbm_to_vmem [thread:$0]  %s0, 448, %s21, [#allocation4]
    $region5: #{tpu_custom_call.1} parent=1 // pred_fallthru
      _
    // Predicated region
    $region6: #{tpu_custom_call.1} parent=1 // pred_check
      _
    $region7: #{tpu_custom_call.1} parent=1 // pred_check_branch
      %25 = sbr.rel (0) target = $region9
    $region8: #{tpu_custom_call.1} parent=1 // pred_region
      %s27 = ssub.s32 14336, 14336
      %28 = vsyncadd [#allocation6], %s27
      %s29 = sshll.u32 [#allocation5], 4
      %s30 = int_to_ptr.vmem [resolvable:$true] %s29
      %35 = dma.hbm_to_vmem [thread:$0]  %s1, 14336, %s30, [#allocation6], 128, 128, 8
    $region9: #{tpu_custom_call.1} parent=1 // pred_fallthru
      _
    // Predicated region
    $region10: #{tpu_custom_call.1} parent=1 // pred_check
      _
    $region11: #{tpu_custom_call.1} parent=1 // pred_check_branch
      %37 = sbr.rel (0) target = $region13
    $region12: #{tpu_custom_call.1} parent=1 // pred_region
      _
    $region13: #{tpu_custom_call.1} parent=1 // pred_fallthru
      _
    // Predicated region
    $region14: #{tpu_custom_call.1} parent=1 // pred_check
      _
    $region15: #{tpu_custom_call.1} parent=1 // pred_check_branch
      %39 = sbr.rel (0) target = $region17
    $region16: #{tpu_custom_call.1} parent=1 // pred_region
      _
    $region17: #{tpu_custom_call.1} parent=1 // pred_fallthru
      _
    // Predicated region
    $region18: #{tpu_custom_call.1} parent=1 // pred_check
      _
    $region19: #{tpu_custom_call.1} parent=1 // pred_check_branch
      %41 = sbr.rel (0) target = $region21
    $region20: #{tpu_custom_call.1} parent=1 // pred_region
      _
    $region21: #{tpu_custom_call.1} parent=1 // pred_fallthru
      _
    // Predicated region
    $region22: #{tpu_custom_call.1} parent=1 // pred_check
      _
    $region23: #{tpu_custom_call.1} parent=1 // pred_check_branch
      %43 = sbr.rel (0) target = $region25
    $region24: #{tpu_custom_call.1} parent=1 // pred_region
      %44 = dma.done [#allocation4], 448
    $region25: #{tpu_custom_call.1} parent=1 // pred_fallthru
      _
    // Predicated region
    $region26: #{tpu_custom_call.1} parent=1 // pred_check
      _
    $region27: #{tpu_custom_call.1} parent=1 // pred_check_branch
      %46 = sbr.rel (0) target = $region29
    $region28: #{tpu_custom_call.1} parent=1 // pred_region
      %47 = dma.done [#allocation6], 14336
    $region29: #{tpu_custom_call.1} parent=1 // pred_fallthru
      _
    %v49 = vld [vmem:[#allocation3] sm:$0xff]
    %v50 = vld [vmem:[#allocation3 + $0x8] sm:$0xff]
    %v51 = vld [vmem:[#allocation3 + $0x10] sm:$0xff]
    %v52 = vld [vmem:[#allocation3 + $0x18] sm:$0xf]
    %v53 = vld [vmem:[#allocation5] sm:$0xff]
    %v54 = vld [vmem:[#allocation5 + $0x8] sm:$0xff]
    %v55 = vld [vmem:[#allocation5 + $0x10] sm:$0xff]
    %v56 = vld [vmem:[#allocation5 + $0x18] sm:$0xff]
    %v57 = vld [vmem:[#allocation5 + $0x20] sm:$0xff]
    %v58 = vld [vmem:[#allocation5 + $0x28] sm:$0xff]
    %v59 = vld [vmem:[#allocation5 + $0x30] sm:$0xff]
    %v60 = vld [vmem:[#allocation5 + $0x38] sm:$0xff]
    %v61 = vld [vmem:[#allocation5 + $0x40] sm:$0xff]
    %v62 = vld [vmem:[#allocation5 + $0x48] sm:$0xff]
    %v63 = vld [vmem:[#allocation5 + $0x50] sm:$0xff]
    %v64 = vld [vmem:[#allocation5 + $0x58] sm:$0xff]
    %v65 = vld [vmem:[#allocation5 + $0x60] sm:$0xff]
    %v66 = vld [vmem:[#allocation5 + $0x68] sm:$0xff]
    %v67 = vld [vmem:[#allocation5 + $0x70] sm:$0xff]
    %v68 = vld [vmem:[#allocation5 + $0x78] sm:$0xff]
    %v69 = vld [vmem:[#allocation5 + $0x80] sm:$0xff]
    %v70 = vld [vmem:[#allocation5 + $0x88] sm:$0xff]
    %v71 = vld [vmem:[#allocation5 + $0x90] sm:$0xff]
    %v72 = vld [vmem:[#allocation5 + $0x98] sm:$0xff]
    %v73 = vld [vmem:[#allocation5 + $0xa0] sm:$0xff]
    %v74 = vld [vmem:[#allocation5 + $0xa8] sm:$0xff]
    %v75 = vld [vmem:[#allocation5 + $0xb0] sm:$0xff]
    %v76 = vld [vmem:[#allocation5 + $0xb8] sm:$0xff]
    %v77 = vld [vmem:[#allocation5 + $0xc0] sm:$0xff]
    %v78 = vld [vmem:[#allocation5 + $0xc8] sm:$0xff]
    %v79 = vld [vmem:[#allocation5 + $0xd0] sm:$0xff]
    %v80 = vld [vmem:[#allocation5 + $0xd8] sm:$0xff]
    %v81 = vld [vmem:[#allocation5 + $0xe0] sm:$0xff]
    %v82 = vld [vmem:[#allocation5 + $0xe8] sm:$0xff]
    %v83 = vld [vmem:[#allocation5 + $0xf0] sm:$0xff]
    %v84 = vld [vmem:[#allocation5 + $0xf8] sm:$0xff]
    %v85 = vld [vmem:[#allocation5 + $0x100] sm:$0xff]
    %v86 = vld [vmem:[#allocation5 + $0x108] sm:$0xff]
    %v87 = vld [vmem:[#allocation5 + $0x110] sm:$0xff]
    %v88 = vld [vmem:[#allocation5 + $0x118] sm:$0xff]
    %v89 = vld [vmem:[#allocation5 + $0x120] sm:$0xff]
    %v90 = vld [vmem:[#allocation5 + $0x128] sm:$0xff]
    %v91 = vld [vmem:[#allocation5 + $0x130] sm:$0xff]
    %v92 = vld [vmem:[#allocation5 + $0x138] sm:$0xff]
    %v93 = vld [vmem:[#allocation5 + $0x140] sm:$0xff]
    %v94 = vld [vmem:[#allocation5 + $0x148] sm:$0xff]
    %v95 = vld [vmem:[#allocation5 + $0x150] sm:$0xff]
    %v96 = vld [vmem:[#allocation5 + $0x158] sm:$0xff]
    %v97 = vld [vmem:[#allocation5 + $0x160] sm:$0xff]
    %v98 = vld [vmem:[#allocation5 + $0x168] sm:$0xff]
    %v99 = vld [vmem:[#allocation5 + $0x170] sm:$0xff]
    %v100 = vld [vmem:[#allocation5 + $0x178] sm:$0xff]
    %v101 = vld [vmem:[#allocation5 + $0x180] sm:$0xff]
    %v102 = vld [vmem:[#allocation5 + $0x188] sm:$0xff]
    %v103 = vld [vmem:[#allocation5 + $0x190] sm:$0xff]
    %v104 = vld [vmem:[#allocation5 + $0x198] sm:$0xff]
    %v105 = vld [vmem:[#allocation5 + $0x1a0] sm:$0xff]
    %v106 = vld [vmem:[#allocation5 + $0x1a8] sm:$0xff]
    %v107 = vld [vmem:[#allocation5 + $0x1b0] sm:$0xff]
    %v108 = vld [vmem:[#allocation5 + $0x1b8] sm:$0xff]
    %v109 = vld [vmem:[#allocation5 + $0x1c0] sm:$0xff]
    %v110 = vld [vmem:[#allocation5 + $0x1c8] sm:$0xff]
    %v111 = vld [vmem:[#allocation5 + $0x1d0] sm:$0xff]
    %v112 = vld [vmem:[#allocation5 + $0x1d8] sm:$0xff]
    %v113 = vld [vmem:[#allocation5 + $0x1e0] sm:$0xff]
    %v114 = vld [vmem:[#allocation5 + $0x1e8] sm:$0xff]
    %v115 = vld [vmem:[#allocation5 + $0x1f0] sm:$0xff]
    %v116 = vld [vmem:[#allocation5 + $0x1f8] sm:$0xff]
    %v117 = vld [vmem:[#allocation5 + $0x200] sm:$0xff]
    %v118 = vld [vmem:[#allocation5 + $0x208] sm:$0xff]
    %v119 = vld [vmem:[#allocation5 + $0x210] sm:$0xff]
    %v120 = vld [vmem:[#allocation5 + $0x218] sm:$0xff]
    %v121 = vld [vmem:[#allocation5 + $0x220] sm:$0xff]
    %v122 = vld [vmem:[#allocation5 + $0x228] sm:$0xff]
    %v123 = vld [vmem:[#allocation5 + $0x230] sm:$0xff]
    %v124 = vld [vmem:[#allocation5 + $0x238] sm:$0xff]
    %v125 = vld [vmem:[#allocation5 + $0x240] sm:$0xff]
    %v126 = vld [vmem:[#allocation5 + $0x248] sm:$0xff]
    %v127 = vld [vmem:[#allocation5 + $0x250] sm:$0xff]
    %v128 = vld [vmem:[#allocation5 + $0x258] sm:$0xff]
    %v129 = vld [vmem:[#allocation5 + $0x260] sm:$0xff]
    %v130 = vld [vmem:[#allocation5 + $0x268] sm:$0xff]
    %v131 = vld [vmem:[#allocation5 + $0x270] sm:$0xff]
    %v132 = vld [vmem:[#allocation5 + $0x278] sm:$0xff]
    %v133 = vld [vmem:[#allocation5 + $0x280] sm:$0xff]
    %v134 = vld [vmem:[#allocation5 + $0x288] sm:$0xff]
    %v135 = vld [vmem:[#allocation5 + $0x290] sm:$0xff]
    %v136 = vld [vmem:[#allocation5 + $0x298] sm:$0xff]
    %v137 = vld [vmem:[#allocation5 + $0x2a0] sm:$0xff]
    %v138 = vld [vmem:[#allocation5 + $0x2a8] sm:$0xff]
    %v139 = vld [vmem:[#allocation5 + $0x2b0] sm:$0xff]
    %v140 = vld [vmem:[#allocation5 + $0x2b8] sm:$0xff]
    %v141 = vld [vmem:[#allocation5 + $0x2c0] sm:$0xff]
    %v142 = vld [vmem:[#allocation5 + $0x2c8] sm:$0xff]
    %v143 = vld [vmem:[#allocation5 + $0x2d0] sm:$0xff]
    %v144 = vld [vmem:[#allocation5 + $0x2d8] sm:$0xff]
    %v145 = vld [vmem:[#allocation5 + $0x2e0] sm:$0xff]
    %v146 = vld [vmem:[#allocation5 + $0x2e8] sm:$0xff]
    %v147 = vld [vmem:[#allocation5 + $0x2f0] sm:$0xff]
    %v148 = vld [vmem:[#allocation5 + $0x2f8] sm:$0xff]
    %v149 = vld [vmem:[#allocation5 + $0x300] sm:$0xff]
    %v150 = vld [vmem:[#allocation5 + $0x308] sm:$0xff]
    %v151 = vld [vmem:[#allocation5 + $0x310] sm:$0xff]
    %v152 = vld [vmem:[#allocation5 + $0x318] sm:$0xff]
    %v153 = vld [vmem:[#allocation5 + $0x320] sm:$0xff]
    %v154 = vld [vmem:[#allocation5 + $0x328] sm:$0xff]
    %v155 = vld [vmem:[#allocation5 + $0x330] sm:$0xff]
    %v156 = vld [vmem:[#allocation5 + $0x338] sm:$0xff]
    %v157 = vld [vmem:[#allocation5 + $0x340] sm:$0xff]
    %v158 = vld [vmem:[#allocation5 + $0x348] sm:$0xff]
    %v159 = vld [vmem:[#allocation5 + $0x350] sm:$0xff]
    %v160 = vld [vmem:[#allocation5 + $0x358] sm:$0xff]
    %v161 = vld [vmem:[#allocation5 + $0x360] sm:$0xff]
    %v162 = vld [vmem:[#allocation5 + $0x368] sm:$0xff]
    %v163 = vld [vmem:[#allocation5 + $0x370] sm:$0xff]
    %v164 = vld [vmem:[#allocation5 + $0x378] sm:$0xff]
    %v165 = vld [vmem:[%s2] sm:$0x3]
    %v167 = vlaneseq
    %v168 = vshrl.u32 %v167, 7
    %v169 = vsub.s32 0, %v168
    %v170 = vrot.slane %v165, %v169
    %v171 = vlaneseq
    %v172 = vshrl.u32 %v171, 7
    %v173 = vsub.s32 1, %v172
    %v174 = vrot.slane %v165, %v173
    %v181 = vunpack.c.l.b16 %v49
    %v182 = vunpack.c.h.b16 %v49
    %v183 = vunpack.c.l.b16 %v50
    %v184 = vunpack.c.h.b16 %v50
    %v185 = vunpack.c.l.b16 %v51
    %v186 = vunpack.c.h.b16 %v51
    %v187 = vunpack.c.l.b16 %v52
    %v188 = vpack.c.b16 %v181, %v181
    %v189 = vpack.c.b16 %v182, %v182
    %v190 = vpack.c.b16 %v183, %v183
    %v191 = vpack.c.b16 %v184, %v184
    %v192 = vpack.c.b16 %v185, %v185
    %v193 = vpack.c.b16 %v186, %v186
    %v194 = vpack.c.b16 %v187, %v187
    %v314 = vunpack.c.l.b16 %v53
    %v315 = vunpack.c.h.b16 %v53
    %v316 = vunpack.c.l.b16 %v54
    %v317 = vunpack.c.h.b16 %v54
    %v318 = vunpack.c.l.b16 %v55
    %v319 = vunpack.c.h.b16 %v55
    %v320 = vunpack.c.l.b16 %v56
    %v321 = vunpack.c.h.b16 %v56
    %v322 = vunpack.c.l.b16 %v57
    %v323 = vunpack.c.h.b16 %v57
    %v324 = vunpack.c.l.b16 %v58
    %v325 = vunpack.c.h.b16 %v58
    %v326 = vunpack.c.l.b16 %v59
    %v327 = vunpack.c.h.b16 %v59
    %v328 = vunpack.c.l.b16 %v60
    %v329 = vunpack.c.h.b16 %v60
    %v330 = vunpack.c.l.b16 %v61
    %v331 = vunpack.c.h.b16 %v61
    %v332 = vunpack.c.l.b16 %v62
    %v333 = vunpack.c.h.b16 %v62
    %v334 = vunpack.c.l.b16 %v63
    %v335 = vunpack.c.h.b16 %v63
    %v336 = vunpack.c.l.b16 %v64
    %v337 = vunpack.c.h.b16 %v64
    %v338 = vunpack.c.l.b16 %v65
    %v339 = vunpack.c.h.b16 %v65
    %v340 = vunpack.c.l.b16 %v66
    %v341 = vunpack.c.h.b16 %v66
    %v342 = vunpack.c.l.b16 %v67
    %v343 = vunpack.c.h.b16 %v67
    %v344 = vunpack.c.l.b16 %v68
    %v345 = vunpack.c.h.b16 %v68
    %v346 = vunpack.c.l.b16 %v69
    %v347 = vunpack.c.h.b16 %v69
    %v348 = vunpack.c.l.b16 %v70
    %v349 = vunpack.c.h.b16 %v70
    %v350 = vunpack.c.l.b16 %v71
    %v351 = vunpack.c.h.b16 %v71
    %v352 = vunpack.c.l.b16 %v72
    %v353 = vunpack.c.h.b16 %v72
    %v354 = vunpack.c.l.b16 %v73
    %v355 = vunpack.c.h.b16 %v73
    %v356 = vunpack.c.l.b16 %v74
    %v357 = vunpack.c.h.b16 %v74
    %v358 = vunpack.c.l.b16 %v75
    %v359 = vunpack.c.h.b16 %v75
    %v360 = vunpack.c.l.b16 %v76
    %v361 = vunpack.c.h.b16 %v76
    %v362 = vunpack.c.l.b16 %v77
    %v363 = vunpack.c.h.b16 %v77
    %v364 = vunpack.c.l.b16 %v78
    %v365 = vunpack.c.h.b16 %v78
    %v366 = vunpack.c.l.b16 %v79
    %v367 = vunpack.c.h.b16 %v79
    %v368 = vunpack.c.l.b16 %v80
    %v369 = vunpack.c.h.b16 %v80
    %v370 = vunpack.c.l.b16 %v81
    %v371 = vunpack.c.h.b16 %v81
    %v372 = vunpack.c.l.b16 %v82
    %v373 = vunpack.c.h.b16 %v82
    %v374 = vunpack.c.l.b16 %v83
    %v375 = vunpack.c.h.b16 %v83
    %v376 = vunpack.c.l.b16 %v84
    %v377 = vunpack.c.h.b16 %v84
    %v378 = vunpack.c.l.b16 %v85
    %v379 = vunpack.c.h.b16 %v85
    %v380 = vunpack.c.l.b16 %v86
    %v381 = vunpack.c.h.b16 %v86
    %v382 = vunpack.c.l.b16 %v87
    %v383 = vunpack.c.h.b16 %v87
    %v384 = vunpack.c.l.b16 %v88
    %v385 = vunpack.c.h.b16 %v88
    %v386 = vunpack.c.l.b16 %v89
    %v387 = vunpack.c.h.b16 %v89
    %v388 = vunpack.c.l.b16 %v90
    %v389 = vunpack.c.h.b16 %v90
    %v390 = vunpack.c.l.b16 %v91
    %v391 = vunpack.c.h.b16 %v91
    %v392 = vunpack.c.l.b16 %v92
    %v393 = vunpack.c.h.b16 %v92
    %v394 = vunpack.c.l.b16 %v93
    %v395 = vunpack.c.h.b16 %v93
    %v396 = vunpack.c.l.b16 %v94
    %v397 = vunpack.c.h.b16 %v94
    %v398 = vunpack.c.l.b16 %v95
    %v399 = vunpack.c.h.b16 %v95
    %v400 = vunpack.c.l.b16 %v96
    %v401 = vunpack.c.h.b16 %v96
    %v402 = vunpack.c.l.b16 %v97
    %v403 = vunpack.c.h.b16 %v97
    %v404 = vunpack.c.l.b16 %v98
    %v405 = vunpack.c.h.b16 %v98
    %v406 = vunpack.c.l.b16 %v99
    %v407 = vunpack.c.h.b16 %v99
    %v408 = vunpack.c.l.b16 %v100
    %v409 = vunpack.c.h.b16 %v100
    %v410 = vunpack.c.l.b16 %v101
    %v411 = vunpack.c.h.b16 %v101
    %v412 = vunpack.c.l.b16 %v102
    %v413 = vunpack.c.h.b16 %v102
    %v414 = vunpack.c.l.b16 %v103
    %v415 = vunpack.c.h.b16 %v103
    %v416 = vunpack.c.l.b16 %v104
    %v417 = vunpack.c.h.b16 %v104
    %v418 = vunpack.c.l.b16 %v105
    %v419 = vunpack.c.h.b16 %v105
    %v420 = vunpack.c.l.b16 %v106
    %v421 = vunpack.c.h.b16 %v106
    %v422 = vunpack.c.l.b16 %v107
    %v423 = vunpack.c.h.b16 %v107
    %v424 = vunpack.c.l.b16 %v108
    %v425 = vunpack.c.h.b16 %v108
    %v426 = vunpack.c.l.b16 %v109
    %v427 = vunpack.c.h.b16 %v109
    %v428 = vunpack.c.l.b16 %v110
    %v429 = vunpack.c.h.b16 %v110
    %v430 = vunpack.c.l.b16 %v111
    %v431 = vunpack.c.h.b16 %v111
    %v432 = vunpack.c.l.b16 %v112
    %v433 = vunpack.c.h.b16 %v112
    %v434 = vunpack.c.l.b16 %v113
    %v435 = vunpack.c.h.b16 %v113
    %v436 = vunpack.c.l.b16 %v114
    %v437 = vunpack.c.h.b16 %v114
    %v438 = vunpack.c.l.b16 %v115
    %v439 = vunpack.c.h.b16 %v115
    %v440 = vunpack.c.l.b16 %v116
    %v441 = vunpack.c.h.b16 %v116
    %v442 = vunpack.c.l.b16 %v117
    %v443 = vunpack.c.h.b16 %v117
    %v444 = vunpack.c.l.b16 %v118
    %v445 = vunpack.c.h.b16 %v118
    %v446 = vunpack.c.l.b16 %v119
    %v447 = vunpack.c.h.b16 %v119
    %v448 = vunpack.c.l.b16 %v120
    %v449 = vunpack.c.h.b16 %v120
    %v450 = vunpack.c.l.b16 %v121
    %v451 = vunpack.c.h.b16 %v121
    %v452 = vunpack.c.l.b16 %v122
    %v453 = vunpack.c.h.b16 %v122
    %v454 = vunpack.c.l.b16 %v123
    %v455 = vunpack.c.h.b16 %v123
    %v456 = vunpack.c.l.b16 %v124
    %v457 = vunpack.c.h.b16 %v124
    %v458 = vunpack.c.l.b16 %v125
    %v459 = vunpack.c.h.b16 %v125
    %v460 = vunpack.c.l.b16 %v126
    %v461 = vunpack.c.h.b16 %v126
    %v462 = vunpack.c.l.b16 %v127
    %v463 = vunpack.c.h.b16 %v127
    %v464 = vunpack.c.l.b16 %v128
    %v465 = vunpack.c.h.b16 %v128
    %v466 = vunpack.c.l.b16 %v129
    %v467 = vunpack.c.h.b16 %v129
    %v468 = vunpack.c.l.b16 %v130
    %v469 = vunpack.c.h.b16 %v130
    %v470 = vunpack.c.l.b16 %v131
    %v471 = vunpack.c.h.b16 %v131
    %v472 = vunpack.c.l.b16 %v132
    %v473 = vunpack.c.h.b16 %v132
    %v474 = vunpack.c.l.b16 %v133
    %v475 = vunpack.c.h.b16 %v133
    %v476 = vunpack.c.l.b16 %v134
    %v477 = vunpack.c.h.b16 %v134
    %v478 = vunpack.c.l.b16 %v135
    %v479 = vunpack.c.h.b16 %v135
    %v480 = vunpack.c.l.b16 %v136
    %v481 = vunpack.c.h.b16 %v136
    %v482 = vunpack.c.l.b16 %v137
    %v483 = vunpack.c.h.b16 %v137
    %v484 = vunpack.c.l.b16 %v138
    %v485 = vunpack.c.h.b16 %v138
    %v486 = vunpack.c.l.b16 %v139
    %v487 = vunpack.c.h.b16 %v139
    %v488 = vunpack.c.l.b16 %v140
    %v489 = vunpack.c.h.b16 %v140
    %v490 = vunpack.c.l.b16 %v141
    %v491 = vunpack.c.h.b16 %v141
    %v492 = vunpack.c.l.b16 %v142
    %v493 = vunpack.c.h.b16 %v142
    %v494 = vunpack.c.l.b16 %v143
    %v495 = vunpack.c.h.b16 %v143
    %v496 = vunpack.c.l.b16 %v144
    %v497 = vunpack.c.h.b16 %v144
    %v498 = vunpack.c.l.b16 %v145
    %v499 = vunpack.c.h.b16 %v145
    %v500 = vunpack.c.l.b16 %v146
    %v501 = vunpack.c.h.b16 %v146
    %v502 = vunpack.c.l.b16 %v147
    %v503 = vunpack.c.h.b16 %v147
    %v504 = vunpack.c.l.b16 %v148
    %v505 = vunpack.c.h.b16 %v148
    %v506 = vunpack.c.l.b16 %v149
    %v507 = vunpack.c.h.b16 %v149
    %v508 = vunpack.c.l.b16 %v150
    %v509 = vunpack.c.h.b16 %v150
    %v510 = vunpack.c.l.b16 %v151
    %v511 = vunpack.c.h.b16 %v151
    %v512 = vunpack.c.l.b16 %v152
    %v513 = vunpack.c.h.b16 %v152
    %v514 = vunpack.c.l.b16 %v153
    %v515 = vunpack.c.h.b16 %v153
    %v516 = vunpack.c.l.b16 %v154
    %v517 = vunpack.c.h.b16 %v154
    %v518 = vunpack.c.l.b16 %v155
    %v519 = vunpack.c.h.b16 %v155
    %v520 = vunpack.c.l.b16 %v156
    %v521 = vunpack.c.h.b16 %v156
    %v522 = vunpack.c.l.b16 %v157
    %v523 = vunpack.c.h.b16 %v157
    %v524 = vunpack.c.l.b16 %v158
    %v525 = vunpack.c.h.b16 %v158
    %v526 = vunpack.c.l.b16 %v159
    %v527 = vunpack.c.h.b16 %v159
    %v528 = vunpack.c.l.b16 %v160
    %v529 = vunpack.c.h.b16 %v160
    %v530 = vunpack.c.l.b16 %v161
    %v531 = vunpack.c.h.b16 %v161
    %v532 = vunpack.c.l.b16 %v162
    %v533 = vunpack.c.h.b16 %v162
    %v534 = vunpack.c.l.b16 %v163
    %v535 = vunpack.c.h.b16 %v163
    %v536 = vunpack.c.l.b16 %v164
    %v537 = vunpack.c.h.b16 %v164
    %v538 = vpack.c.b16 %v316, %v314
    %v539 = vpack.c.b16 %v317, %v315
    %v540 = vpack.c.b16 %v320, %v318
    %v541 = vpack.c.b16 %v321, %v319
    %v542 = vpack.c.b16 %v324, %v322
    %v543 = vpack.c.b16 %v325, %v323
    %v544 = vpack.c.b16 %v328, %v326
    %v545 = vpack.c.b16 %v329, %v327
    %v546 = vpack.c.b16 %v332, %v330
    %v547 = vpack.c.b16 %v333, %v331
    %v548 = vpack.c.b16 %v336, %v334
    %v549 = vpack.c.b16 %v337, %v335
    %v550 = vpack.c.b16 %v340, %v338
    %v551 = vpack.c.b16 %v341, %v339
    %v552 = vpack.c.b16 %v344, %v342
    %v553 = vpack.c.b16 %v345, %v343
    %v554 = vpack.c.b16 %v348, %v346
    %v555 = vpack.c.b16 %v349, %v347
    %v556 = vpack.c.b16 %v352, %v350
    %v557 = vpack.c.b16 %v353, %v351
    %v558 = vpack.c.b16 %v356, %v354
    %v559 = vpack.c.b16 %v357, %v355
    %v560 = vpack.c.b16 %v360, %v358
    %v561 = vpack.c.b16 %v361, %v359
    %v562 = vpack.c.b16 %v364, %v362
    %v563 = vpack.c.b16 %v365, %v363
    %v564 = vpack.c.b16 %v368, %v366
    %v565 = vpack.c.b16 %v369, %v367
    %v566 = vpack.c.b16 %v372, %v370
    %v567 = vpack.c.b16 %v373, %v371
    %v568 = vpack.c.b16 %v376, %v374
    %v569 = vpack.c.b16 %v377, %v375
    %v570 = vpack.c.b16 %v380, %v378
    %v571 = vpack.c.b16 %v381, %v379
    %v572 = vpack.c.b16 %v384, %v382
    %v573 = vpack.c.b16 %v385, %v383
    %v574 = vpack.c.b16 %v388, %v386
    %v575 = vpack.c.b16 %v389, %v387
    %v576 = vpack.c.b16 %v392, %v390
    %v577 = vpack.c.b16 %v393, %v391
    %v578 = vpack.c.b16 %v396, %v394
    %v579 = vpack.c.b16 %v397, %v395
    %v580 = vpack.c.b16 %v400, %v398
    %v581 = vpack.c.b16 %v401, %v399
    %v582 = vpack.c.b16 %v404, %v402
    %v583 = vpack.c.b16 %v405, %v403
    %v584 = vpack.c.b16 %v408, %v406
    %v585 = vpack.c.b16 %v409, %v407
    %v586 = vpack.c.b16 %v412, %v410
    %v587 = vpack.c.b16 %v413, %v411
    %v588 = vpack.c.b16 %v416, %v414
    %v589 = vpack.c.b16 %v417, %v415
    %v590 = vpack.c.b16 %v420, %v418
    %v591 = vpack.c.b16 %v421, %v419
    %v592 = vpack.c.b16 %v424, %v422
    %v593 = vpack.c.b16 %v425, %v423
    %v594 = vpack.c.b16 %v428, %v426
    %v595 = vpack.c.b16 %v429, %v427
    %v596 = vpack.c.b16 %v432, %v430
    %v597 = vpack.c.b16 %v433, %v431
    %v598 = vpack.c.b16 %v436, %v434
    %v599 = vpack.c.b16 %v437, %v435
    %v600 = vpack.c.b16 %v440, %v438
    %v601 = vpack.c.b16 %v441, %v439
    %v602 = vpack.c.b16 %v444, %v442
    %v603 = vpack.c.b16 %v445, %v443
    %v604 = vpack.c.b16 %v448, %v446
    %v605 = vpack.c.b16 %v449, %v447
    %v606 = vpack.c.b16 %v452, %v450
    %v607 = vpack.c.b16 %v453, %v451
    %v608 = vpack.c.b16 %v456, %v454
    %v609 = vpack.c.b16 %v457, %v455
    %v610 = vpack.c.b16 %v460, %v458
    %v611 = vpack.c.b16 %v461, %v459
    %v612 = vpack.c.b16 %v464, %v462
    %v613 = vpack.c.b16 %v465, %v463
    %v614 = vpack.c.b16 %v468, %v466
    %v615 = vpack.c.b16 %v469, %v467
    %v616 = vpack.c.b16 %v472, %v470
    %v617 = vpack.c.b16 %v473, %v471
    %v618 = vpack.c.b16 %v476, %v474
    %v619 = vpack.c.b16 %v477, %v475
    %v620 = vpack.c.b16 %v480, %v478
    %v621 = vpack.c.b16 %v481, %v479
    %v622 = vpack.c.b16 %v484, %v482
    %v623 = vpack.c.b16 %v485, %v483
    %v624 = vpack.c.b16 %v488, %v486
    %v625 = vpack.c.b16 %v489, %v487
    %v626 = vpack.c.b16 %v492, %v490
    %v627 = vpack.c.b16 %v493, %v491
    %v628 = vpack.c.b16 %v496, %v494
    %v629 = vpack.c.b16 %v497, %v495
    %v630 = vpack.c.b16 %v500, %v498
    %v631 = vpack.c.b16 %v501, %v499
    %v632 = vpack.c.b16 %v504, %v502
    %v633 = vpack.c.b16 %v505, %v503
    %v634 = vpack.c.b16 %v508, %v506
    %v635 = vpack.c.b16 %v509, %v507
    %v636 = vpack.c.b16 %v512, %v510
    %v637 = vpack.c.b16 %v513, %v511
    %v638 = vpack.c.b16 %v516, %v514
    %v639 = vpack.c.b16 %v517, %v515
    %v640 = vpack.c.b16 %v520, %v518
    %v641 = vpack.c.b16 %v521, %v519
    %v642 = vpack.c.b16 %v524, %v522
    %v643 = vpack.c.b16 %v525, %v523
    %v644 = vpack.c.b16 %v528, %v526
    %v645 = vpack.c.b16 %v529, %v527
    %v646 = vpack.c.b16 %v532, %v530
    %v647 = vpack.c.b16 %v533, %v531
    %v648 = vpack.c.b16 %v536, %v534
    %v649 = vpack.c.b16 %v537, %v535
    %762 = vmatprep.subr.bf16.mxu0 %v539
    %763 = vmatpush1.bf16.msra.mxu0 %v538
    %764 = vmatprep.subr.bf16.mxu0 %v541
    %765 = vmatpush1.bf16.msra.mxu0 %v540
    %766 = vmatprep.subr.bf16.mxu0 %v543
    %767 = vmatpush1.bf16.msra.mxu0 %v542
    %768 = vmatprep.subr.bf16.mxu0 %v545
    %769 = vmatpush1.bf16.msra.mxu0 %v544
    %770 = vmatprep.subr.bf16.mxu0 %v547
    %771 = vmatpush1.bf16.msra.mxu0 %v546
    %772 = vmatprep.subr.bf16.mxu0 %v549
    %773 = vmatpush1.bf16.msra.mxu0 %v548
    %774 = vmatprep.subr.bf16.mxu0 %v551
    %775 = vmatpush1.bf16.msra.mxu0 %v550
    %776 = vmatprep.subr.bf16.mxu0 %v553
    %777 = vmatpush1.bf16.msra.mxu0 %v552
    %778 = vmatprep.subr.bf16.mxu0 %v555
    %779 = vmatpush1.bf16.msra.mxu0 %v554
    %780 = vmatprep.subr.bf16.mxu0 %v557
    %781 = vmatpush1.bf16.msra.mxu0 %v556
    %782 = vmatprep.subr.bf16.mxu0 %v559
    %783 = vmatpush1.bf16.msra.mxu0 %v558
    %784 = vmatprep.subr.bf16.mxu0 %v561
    %785 = vmatpush1.bf16.msra.mxu0 %v560
    %786 = vmatprep.subr.bf16.mxu0 %v563
    %787 = vmatpush1.bf16.msra.mxu0 %v562
    %788 = vmatprep.subr.bf16.mxu0 %v565
    %789 = vmatpush1.bf16.msra.mxu0 %v564
    %790 = vmatprep.subr.bf16.mxu0 %v567
    %791 = vmatpush1.bf16.msra.mxu0 %v566
    %792 = vmatprep.subr.bf16.mxu0 %v569
    %793 = vmatpush1.bf16.msra.mxu0 %v568
    %794 = vmatprep.mubr.bf16.mxu0 %v189
    %795 = vmatmul.mubr.bf16.gmra.mrb[0].mxu0 %v188
    %v796 = vpop.f32.mrb[0].mxu0
    %v797 = vadd.f32 %v170, %v796
    %v798 = vpop.f32.mrb[0].mxu0
    %v799 = vadd.f32 %v174, %v798
    %v800 = vpop.f32.mrb[0].mxu0
    %v801 = vpop.f32.mrb[0].mxu0
    %802 = vdwg.mxu0
    %803 = vmatprep.subr.bf16.mxu0 %v571
    %804 = vmatpush1.bf16.msra.mxu0 %v570
    %805 = vmatprep.subr.bf16.mxu0 %v573
    %806 = vmatpush1.bf16.msra.mxu0 %v572
    %807 = vmatprep.subr.bf16.mxu0 %v575
    %808 = vmatpush1.bf16.msra.mxu0 %v574
    %809 = vmatprep.subr.bf16.mxu0 %v577
    %810 = vmatpush1.bf16.msra.mxu0 %v576
    %811 = vmatprep.subr.bf16.mxu0 %v579
    %812 = vmatpush1.bf16.msra.mxu0 %v578
    %813 = vmatprep.subr.bf16.mxu0 %v581
    %814 = vmatpush1.bf16.msra.mxu0 %v580
    %815 = vmatprep.subr.bf16.mxu0 %v583
    %816 = vmatpush1.bf16.msra.mxu0 %v582
    %817 = vmatprep.subr.bf16.mxu0 %v585
    %818 = vmatpush1.bf16.msra.mxu0 %v584
    %819 = vmatprep.subr.bf16.mxu0 %v587
    %820 = vmatpush1.bf16.msra.mxu0 %v586
    %821 = vmatprep.subr.bf16.mxu0 %v589
    %822 = vmatpush1.bf16.msra.mxu0 %v588
    %823 = vmatprep.subr.bf16.mxu0 %v591
    %824 = vmatpush1.bf16.msra.mxu0 %v590
    %825 = vmatprep.subr.bf16.mxu0 %v593
    %826 = vmatpush1.bf16.msra.mxu0 %v592
    %827 = vmatprep.subr.bf16.mxu0 %v595
    %828 = vmatpush1.bf16.msra.mxu0 %v594
    %829 = vmatprep.subr.bf16.mxu0 %v597
    %830 = vmatpush1.bf16.msra.mxu0 %v596
    %831 = vmatprep.subr.bf16.mxu0 %v599
    %832 = vmatpush1.bf16.msra.mxu0 %v598
    %833 = vmatprep.subr.bf16.mxu0 %v601
    %834 = vmatpush1.bf16.msra.mxu0 %v600
    %835 = vmatprep.mubr.bf16.mxu0 %v191
    %836 = vmatmul.mubr.bf16.gmra.mrb[0].mxu0 %v190
    %v837 = vpop.f32.mrb[0].mxu0
    %v838 = vadd.f32 %v797, %v837
    %v839 = vpop.f32.mrb[0].mxu0
    %v840 = vadd.f32 %v799, %v839
    %v841 = vpop.f32.mrb[0].mxu0
    %v842 = vpop.f32.mrb[0].mxu0
    %843 = vdwg.mxu0
    %844 = vmatprep.subr.bf16.mxu0 %v603
    %845 = vmatpush1.bf16.msra.mxu0 %v602
    %846 = vmatprep.subr.bf16.mxu0 %v605
    %847 = vmatpush1.bf16.msra.mxu0 %v604
    %848 = vmatprep.subr.bf16.mxu0 %v607
    %849 = vmatpush1.bf16.msra.mxu0 %v606
    %850 = vmatprep.subr.bf16.mxu0 %v609
    %851 = vmatpush1.bf16.msra.mxu0 %v608
    %852 = vmatprep.subr.bf16.mxu0 %v611
    %853 = vmatpush1.bf16.msra.mxu0 %v610
    %854 = vmatprep.subr.bf16.mxu0 %v613
    %855 = vmatpush1.bf16.msra.mxu0 %v612
    %856 = vmatprep.subr.bf16.mxu0 %v615
    %857 = vmatpush1.bf16.msra.mxu0 %v614
    %858 = vmatprep.subr.bf16.mxu0 %v617
    %859 = vmatpush1.bf16.msra.mxu0 %v616
    %860 = vmatprep.subr.bf16.mxu0 %v619
    %861 = vmatpush1.bf16.msra.mxu0 %v618
    %862 = vmatprep.subr.bf16.mxu0 %v621
    %863 = vmatpush1.bf16.msra.mxu0 %v620
    %864 = vmatprep.subr.bf16.mxu0 %v623
    %865 = vmatpush1.bf16.msra.mxu0 %v622
    %866 = vmatprep.subr.bf16.mxu0 %v625
    %867 = vmatpush1.bf16.msra.mxu0 %v624
    %868 = vmatprep.subr.bf16.mxu0 %v627
    %869 = vmatpush1.bf16.msra.mxu0 %v626
    %870 = vmatprep.subr.bf16.mxu0 %v629
    %871 = vmatpush1.bf16.msra.mxu0 %v628
    %872 = vmatprep.subr.bf16.mxu0 %v631
    %873 = vmatpush1.bf16.msra.mxu0 %v630
    %874 = vmatprep.subr.bf16.mxu0 %v633
    %875 = vmatpush1.bf16.msra.mxu0 %v632
    %876 = vmatprep.mubr.bf16.mxu0 %v193
    %877 = vmatmul.mubr.bf16.gmra.mrb[0].mxu0 %v192
    %v878 = vpop.f32.mrb[0].mxu0
    %v879 = vadd.f32 %v838, %v878
    %v880 = vpop.f32.mrb[0].mxu0
    %v881 = vadd.f32 %v840, %v880
    %v882 = vpop.f32.mrb[0].mxu0
    %v883 = vpop.f32.mrb[0].mxu0
    %884 = vdwg.mxu0
    %885 = vmatprep.subr.bf16.mxu0 %v635
    %886 = vmatpush1.bf16.msra.mxu0 %v634
    %887 = vmatprep.subr.bf16.mxu0 %v637
    %888 = vmatpush1.bf16.msra.mxu0 %v636
    %889 = vmatprep.subr.bf16.mxu0 %v639
    %890 = vmatpush1.bf16.msra.mxu0 %v638
    %891 = vmatprep.subr.bf16.mxu0 %v641
    %892 = vmatpush1.bf16.msra.mxu0 %v640
    %893 = vmatprep.subr.bf16.mxu0 %v643
    %894 = vmatpush1.bf16.msra.mxu0 %v642
    %895 = vmatprep.subr.bf16.mxu0 %v645
    %896 = vmatpush1.bf16.msra.mxu0 %v644
    %897 = vmatprep.subr.bf16.mxu0 %v647
    %898 = vmatpush1.bf16.msra.mxu0 %v646
    %899 = vmatprep.subr.bf16.mxu0 %v649
    %900 = vmatpush1.bf16.msra.mxu0 %v648
    %901 = vmatprep.subr.bf16.mxu0 0
    %902 = vmatpush1.bf16.msra.mxu0 0
    %903 = vmatprep.subr.bf16.mxu0 0
    %904 = vmatpush1.bf16.msra.mxu0 0
    %905 = vmatprep.subr.bf16.mxu0 0
    %906 = vmatpush1.bf16.msra.mxu0 0
    %907 = vmatprep.subr.bf16.mxu0 0
    %908 = vmatpush1.bf16.msra.mxu0 0
    %909 = vmatprep.subr.bf16.mxu0 0
    %910 = vmatpush1.bf16.msra.mxu0 0
    %911 = vmatprep.subr.bf16.mxu0 0
    %912 = vmatpush1.bf16.msra.mxu0 0
    %913 = vmatprep.subr.bf16.mxu0 0
    %914 = vmatpush1.bf16.msra.mxu0 0
    %915 = vmatprep.subr.bf16.mxu0 0
    %916 = vmatpush1.bf16.msra.mxu0 0
    %917 = vmatprep.mubr.bf16.mxu0 0
    %918 = vmatmul.mubr.bf16.gmra.mrb[0].mxu0 %v194
    %v919 = vpop.f32.mrb[0].mxu0
    %v920 = vadd.f32 %v879, %v919
    %v921 = vpop.f32.mrb[0].mxu0
    %v922 = vadd.f32 %v881, %v921
    %v923 = vpop.f32.mrb[0].mxu0
    %v924 = vpop.f32.mrb[0].mxu0
    %925 = vdwg.mxu0
    %v926 = vmax.f32 %v920, 0.0
    %v927 = vmax.f32 %v922, 0.0
    %v928 = vld [vmem:[%s3] sm:$0x3]
    %v930 = vlaneseq
    %v931 = vshrl.u32 %v930, 7
    %v932 = vsub.s32 0, %v931
    %v933 = vrot.slane %v928, %v932
    %v934 = vlaneseq
    %v935 = vshrl.u32 %v934, 7
    %v936 = vsub.s32 1, %v935
    %v937 = vrot.slane %v928, %v936
    %v940 = vmul.f32 %v926, %v933
    %v941 = vmul.f32 %v927, %v937
    %v942 = vadd.f32 %v940, %v941
    %943 = vadd.xlane.f32.xlu0 %v942
    %v944 = vpop.xlane.xlu0 %943
    %v945 = vld [vmem:[#allocation2] sm:$0x1]
    %v947 = vlaneseq
    %v948 = vshrl.u32 %v947, 7
    %v949 = vsub.s32 0, %v948
    %v950 = vrot.slane %v945, %v949
    %v952 = vadd.f32 %v944, %v950
    %v953 = vxor.u32 %v952, 2147483648
    %v954 = vmul.f32 %v953, 1.442695
    %v955 = vpow.pop %v954
    %v956 = vadd.f32 %v955, 1.0
    %v957 = vrcp.pop %v956
    %v958 = vmul.f32 1.0, %v957
    %vm959 = vcmask 7168
    %960 = vst.msk [vmem:[%s5] sm:$0xff] %vm959, %v958
    // Predicated region
    $region30: #{tpu_custom_call.1} parent=1 // pred_check
      _
    $region31: #{tpu_custom_call.1} parent=1 // pred_check_branch
      %962 = sbr.rel (0) target = $region33
    $region32: #{tpu_custom_call.1} parent=1 // pred_region
      _
    $region33: #{tpu_custom_call.1} parent=1 // pred_fallthru
      _
    // Predicated region
    $region34: #{tpu_custom_call.1} parent=1 // pred_check
      _
    $region35: #{tpu_custom_call.1} parent=1 // pred_check_branch
      %964 = sbr.rel (0) target = $region37
    $region36: #{tpu_custom_call.1} parent=1 // pred_region
      _
    $region37: #{tpu_custom_call.1} parent=1 // pred_fallthru
      _
    %965 = vsyncpa [#allocation4], 1
    %966 = vsyncpa [#allocation6], 1

</llo_original>
